<compile_context>
chip_gen: v7x
topology: tpu7x:2x2x1
jax: 0.10.0
libtpu: 0.0.40
codegen_flags: <defaults>
</compile_context>

<pallas_src>
import jax
import jax.numpy as jnp
from jax.experimental import pallas as pl
from jax.experimental.pallas import tpu as pltpu

LANE = 128


# --------------------------------------------------------------------------- #
# helpers
# --------------------------------------------------------------------------- #
def _row_tile(n, cap):
    """Largest divisor of n that is a multiple of 8 and <= cap (else full n)."""
    for t in range(min(n, cap), 7, -1):
        if n % t == 0 and t % 8 == 0:
            return t
    return n


def _col_tile(n, cap):
    """Largest divisor of n that is a multiple of 128 and <= cap (else full n)."""
    for t in range(min(n, cap), 127, -1):
        if n % t == 0 and t % 128 == 0:
            return t
    return n


def _vmem_limit(nbytes):
    # size the scoped-VMEM request to the actual resident set (+ headroom)
    return int(min(max(2 * nbytes, 8 * 1024 * 1024), 100 * 1024 * 1024))


# --------------------------------------------------------------------------- #
# Kernel 1: one SGC propagation step  out = A_hat @ M  (tiled, bf16 A, f32 acc)
# --------------------------------------------------------------------------- #
def _propagate_kernel(adj_ref, m_ref, out_ref, acc_ref):
    k = pl.program_id(1)

    @pl.when(k == 0)
    def _():
        acc_ref[...] = jnp.zeros_like(acc_ref)

    acc_ref[...] += jnp.dot(adj_ref[...],
                            m_ref[...].astype(jnp.bfloat16),
                            preferred_element_type=jnp.float32)

    @pl.when(k == pl.num_programs(1) - 1)
    def _():
        out_ref[...] = acc_ref[...]


def sgc_propagate(adj_bf16, m, *, row_cap=512, col_cap=512):
    n, f = m.shape
    tm = _row_tile(n, row_cap)
    tk = _col_tile(n, col_cap)
    grid = (n // tm, n // tk)

    # double-buffered adj + feature tiles, double-buffered out, f32 accumulator
    vmem = 2 * tm * tk * 2 + 2 * tk * f * 4 + 2 * tm * f * 4 + tm * f * 4
    cost = pl.CostEstimate(
        flops=2 * n * n * f,
        transcendentals=0,
        bytes_accessed=n * n * 2 + (n // tm) * n * f * 4 + n * f * 4)

    return pl.pallas_call(
        _propagate_kernel,
        out_shape=jax.ShapeDtypeStruct((n, f), jnp.float32),
        grid_spec=pltpu.PrefetchScalarGridSpec(
            num_scalar_prefetch=0,
            grid=grid,
            in_specs=[
                pl.BlockSpec((tm, tk), lambda i, k: (i, k)),   # bf16 adjacency tile
                pl.BlockSpec((tk, f), lambda i, k: (k, 0)),    # feature slab for k
            ],
            out_specs=pl.BlockSpec((tm, f), lambda i, k: (i, 0)),
            scratch_shapes=[pltpu.VMEM((tm, f), jnp.float32)]),
        compiler_params=pltpu.CompilerParams(
            dimension_semantics=("parallel", "arbitrary"),
            vmem_limit_bytes=_vmem_limit(vmem)),
        cost_estimate=cost,
    )(adj_bf16, m)


# --------------------------------------------------------------------------- #
# Kernel 2: fused head — SGConv projection + FM + AFM + final linear
# --------------------------------------------------------------------------- #
def _head_kernel(p2_ref, xs_ref,
                 w_sgc_ref, v_ref, v2_ref,
                 w_attn_ref, b_attn_ref, p_attn_ref,
                 wf_h_ref, wf_a_ref, bf_ref,
                 out_ref):
    f32 = jnp.float32

    # ---- SGConv projection (bias=False): h = (A_hat^2 x) @ W ----
    h = jnp.dot(p2_ref[...], w_sgc_ref[...], preferred_element_type=f32)

    # ---- FMLayer 2nd-order term (V^2 precomputed in the wrapper) ----
    xs = xs_ref[...]
    sum_vx = jnp.dot(xs, v_ref[...], preferred_element_type=f32)
    sum_v2x2 = jnp.dot(xs * xs, v2_ref[...], preferred_element_type=f32)
    x_right = 0.5 * (sum_vx * sum_vx - sum_v2x2)

    # ---- AttentionalFactorizationMachine on the single (h, x_right) pair ----
    inter = h * x_right
    e = jnp.maximum(
        jnp.dot(inter, w_attn_ref[...], preferred_element_type=f32) + b_attn_ref[...],
        0.0)
    # width-1 attention projection as VPU multiply + lane reduce (keeps MXU free)
    score = jnp.sum(e * p_attn_ref[...], axis=-1, keepdims=True)
    gate = jax.nn.sigmoid(score)
    attn_out = gate * inter

    # ---- final_linear on concat([h, attn_out]) (split-weight form), lane-dense
    #      128-padded output -> unmasked vector stores ----
    out_ref[...] = (jnp.dot(h, wf_h_ref[...], preferred_element_type=f32)
                    + jnp.dot(attn_out, wf_a_ref[...], preferred_element_type=f32)
                    + bf_ref[...])


# --------------------------------------------------------------------------- #
# forward wrapper
# --------------------------------------------------------------------------- #
def simplegcn_forward(adj_norm, features, x_sparse, params):
    n, in_feats = features.shape
    h_dim = params["W_sgc"].shape[1]
    out_dim = params["b_final"].shape[-1]
    out_pad = max(LANE, ((out_dim + LANE - 1) // LANE) * LANE)

    # bf16 adjacency: halves HBM traffic / VMEM footprint of the only O(N^2) buffer.
    adj_bf16 = adj_norm.astype(jnp.bfloat16)

    # SGConv k=2 propagation: p2 = A_hat @ (A_hat @ x)
    p1 = sgc_propagate(adj_bf16, features)
    p2 = sgc_propagate(adj_bf16, p1)

    # Loop-invariant weight precompute (outside the kernel).
    v2 = params["V_fm"] * params["V_fm"]
    wf = params["W_final"]                                   # [2H, out_dim]
    wf_h = jnp.zeros((h_dim, out_pad), jnp.float32).at[:, :out_dim].set(wf[:h_dim])
    wf_a = jnp.zeros((h_dim, out_pad), jnp.float32).at[:, :out_dim].set(wf[h_dim:])
    bf_p = jnp.zeros((1, out_pad), jnp.float32).at[:, :out_dim].set(params["b_final"])

    tm = _row_tile(n, 256)
    grid = (n // tm,)

    weight_bytes = (in_feats * h_dim * 3 + h_dim * h_dim + 2 * h_dim
                    + 2 * h_dim * out_pad + out_pad) * 4
    vmem = 2 * (2 * tm * in_feats * 4) + 2 * tm * out_pad * 4 + weight_bytes

    def full(a):
        nd = a.ndim
        return pl.BlockSpec(a.shape, lambda i: (0,) * nd)

    out_full = pl.pallas_call(
        _head_kernel,
        out_shape=jax.ShapeDtypeStruct((n, out_pad), jnp.float32),
        grid_spec=pltpu.PrefetchScalarGridSpec(
            num_scalar_prefetch=0,
            grid=grid,
            in_specs=[
                pl.BlockSpec((tm, in_feats), lambda i: (i, 0)),   # propagated rows
                pl.BlockSpec((tm, in_feats), lambda i: (i, 0)),   # sparse FM rows
                full(params["W_sgc"]), full(params["V_fm"]), full(v2),
                full(params["W_attn"]), full(params["b_attn"]), full(params["p_attn"]),
                full(wf_h), full(wf_a), full(bf_p),
            ],
            out_specs=pl.BlockSpec((tm, out_pad), lambda i: (i, 0))),
        compiler_params=pltpu.CompilerParams(
            dimension_semantics=("parallel",),
            vmem_limit_bytes=_vmem_limit(vmem)),
    )(p2, x_sparse, params["W_sgc"], params["V_fm"], v2,
      params["W_attn"], params["b_attn"], params["p_attn"],
      wf_h, wf_a, bf_p)

    return out_full[:, :out_dim]


# --------------------------------------------------------------------------- #
# parameter init (matches SimpleGCN module shapes)
# --------------------------------------------------------------------------- #
def _init_params(key, in_feats, n_hidden, n_classes):
    ks = jax.random.split(key, 7)
    s = 0.1
    return {
        "W_sgc":   s * jax.random.normal(ks[0], (in_feats, n_hidden), jnp.float32),
        "V_fm":    s * jax.random.normal(ks[1], (in_feats, n_hidden), jnp.float32),
        "W_attn":  s * jax.random.normal(ks[2], (n_hidden, n_hidden), jnp.float32),
        "b_attn":  s * jax.random.normal(ks[3], (1, n_hidden), jnp.float32),
        "p_attn":  s * jax.random.normal(ks[4], (1, n_hidden), jnp.float32),
        "W_final": s * jax.random.normal(ks[5], (2 * n_hidden, n_classes), jnp.float32),
        "b_final": s * jax.random.normal(ks[6], (1, n_classes), jnp.float32),
    }


if __name__ == "__main__":
    N, IN_FEATS, N_HIDDEN, N_CLASSES, NNZ = 64, 32, 32, 8, 4

    key = jax.random.PRNGKey(0)
    k_feat, k_adj, k_idx, k_val, k_par = jax.random.split(key, 5)

    # Node features [N, in_feats]
    features = jax.random.normal(k_feat, (N, IN_FEATS), jnp.float32)

    # Random undirected graph -> dense symmetric-normalized adjacency
    # (DGL SGConv normalization D^-1/2 A D^-1/2, degrees clamped to >= 1).
    a = (jax.random.uniform(k_adj, (N, N)) < 0.1).astype(jnp.float32)
    a = jnp.maximum(a, a.T)
    deg = jnp.maximum(a.sum(axis=1), 1.0)
    d_inv_sqrt = 1.0 / jnp.sqrt(deg)
    adj_norm = a * d_inv_sqrt[:, None] * d_inv_sqrt[None, :]

    # Sparse FM inputs (nonzer_index, nonzer_value) densified to [N, in_feats].
    nonzer_index = jax.random.randint(k_idx, (N, NNZ), 0, IN_FEATS)
    nonzer_value = jax.random.normal(k_val, (N, NNZ), jnp.float32)
    rows = jnp.arange(N)[:, None]
    x_sparse = jnp.zeros((N, IN_FEATS), jnp.float32).at[rows, nonzer_index].add(
        nonzer_value)

    params = _init_params(k_par, IN_FEATS, N_HIDDEN, N_CLASSES)

    out = simplegcn_forward(adj_norm, features, x_sparse, params)
    out = jax.block_until_ready(out)
    assert out.shape == (N, N_CLASSES) and out.dtype == jnp.float32
    print("KERNEL_OK")
</pallas_src>

<mosaic_0001>
module attributes {stable_mosaic.version = 11 : i64} {
  func.func @_propagate_kernel(%arg0: i32, %arg1: i32, %arg2: memref<64x64xbf16, #tpu.memory_space<vmem>>, %arg3: memref<64x32xf32, #tpu.memory_space<vmem>>, %arg4: memref<64x32xf32, #tpu.memory_space<vmem>>, %arg5: memref<64x32xf32, #tpu.memory_space<vmem>>) attributes {dimension_semantics = [#tpu.dimension_semantics<parallel>, #tpu.dimension_semantics<arbitrary>], iteration_bounds = array<i64: 1, 1>, scalar_prefetch = 0 : i64, scratch_operands = 1 : i64, tpu.core_type = #tpu.core_type<tc>, window_params = [{transform_indices = @transform_0, window_bounds = array<i64: 64, 64>}, {transform_indices = @transform_1, window_bounds = array<i64: 64, 32>}, {transform_indices = @transform_2, window_bounds = array<i64: 64, 32>}]} {
    %c0_i32 = arith.constant 0 : i32
    %0 = arith.cmpi eq, %arg1, %c0_i32 : i32
    %1 = arith.extui %0 : i1 to i32
    %c0_i32_0 = arith.constant 0 : i32
    %2 = arith.cmpi ne, %1, %c0_i32_0 : i32
    scf.if %2 {
      %cst_10 = arith.constant 0.000000e+00 : f32
      %13 = vector.broadcast %cst_10 : f32 to vector<64x32xf32>
      %c0_11 = arith.constant 0 : index
      %c0_12 = arith.constant 0 : index
      %14 = vector.load %arg5[%c0_11, %c0_12] : memref<64x32xf32, #tpu.memory_space<vmem>>, vector<64x32xf32>
      tpu.vector_store %arg5[%c0_11, %c0_12], %13 {strides = array<i32>} : memref<64x32xf32, #tpu.memory_space<vmem>>, vector<64x32xf32>,
    } else {
    }
    %c0 = arith.constant 0 : index
    %c0_1 = arith.constant 0 : index
    %3 = vector.load %arg5[%c0, %c0_1] : memref<64x32xf32, #tpu.memory_space<vmem>>, vector<64x32xf32>
    %c0_2 = arith.constant 0 : index
    %c0_3 = arith.constant 0 : index
    %4 = vector.load %arg2[%c0_2, %c0_3] : memref<64x64xbf16, #tpu.memory_space<vmem>>, vector<64x64xbf16>
    %c0_4 = arith.constant 0 : index
    %c0_5 = arith.constant 0 : index
    %5 = vector.load %arg3[%c0_4, %c0_5] : memref<64x32xf32, #tpu.memory_space<vmem>>, vector<64x32xf32>
    %6 = arith.truncf %5 : vector<64x32xf32> to vector<64x32xbf16>
    %cst = arith.constant dense<0.000000e+00> : vector<64x32xf32>
    %7 = tpu.matmul %4, %6, %cst {dimension_numbers = #tpu.dot_dimension_numbers<[1], [0], [0], [1], [0, 0, 1, 1], [], []>} : vector<64x64xbf16>, vector<64x32xbf16>, vector<64x32xf32> -> vector<64x32xf32>
    %8 = arith.addf %3, %7 : vector<64x32xf32>
    %c0_6 = arith.constant 0 : index
    %c0_7 = arith.constant 0 : index
    %9 = vector.load %arg5[%c0_6, %c0_7] : memref<64x32xf32, #tpu.memory_space<vmem>>, vector<64x32xf32>
    tpu.vector_store %arg5[%c0_6, %c0_7], %8 {strides = array<i32>} : memref<64x32xf32, #tpu.memory_space<vmem>>, vector<64x32xf32>,
    %c0_i32_8 = arith.constant 0 : i32
    %10 = arith.cmpi eq, %arg1, %c0_i32_8 : i32
    %11 = arith.extui %10 : i1 to i32
    %c0_i32_9 = arith.constant 0 : i32
    %12 = arith.cmpi ne, %11, %c0_i32_9 : i32
    scf.if %12 {
      %c0_10 = arith.constant 0 : index
      %c0_11 = arith.constant 0 : index
      %13 = vector.load %arg5[%c0_10, %c0_11] : memref<64x32xf32, #tpu.memory_space<vmem>>, vector<64x32xf32>
      %c0_12 = arith.constant 0 : index
      %c0_13 = arith.constant 0 : index
      %14 = vector.load %arg4[%c0_12, %c0_13] : memref<64x32xf32, #tpu.memory_space<vmem>>, vector<64x32xf32>
      tpu.vector_store %arg4[%c0_12, %c0_13], %13 {strides = array<i32>} : memref<64x32xf32, #tpu.memory_space<vmem>>, vector<64x32xf32>,
    } else {
    }
    return
  }
  func.func @transform_0(%arg0: i32, %arg1: i32) -> (i32, i32) {
    %c0_i32 = arith.constant 0 : i32
    return %arg0, %arg1 : i32, i32
  }
  func.func @transform_1(%arg0: i32, %arg1: i32) -> (i32, i32) {
    %c0_i32 = arith.constant 0 : i32
    %c0_i32_0 = arith.constant 0 : i32
    return %arg1, %c0_i32 : i32, i32
  }
  func.func @transform_2(%arg0: i32, %arg1: i32) -> (i32, i32) {
    %c0_i32 = arith.constant 0 : i32
    %c0_i32_0 = arith.constant 0 : i32
    return %arg0, %c0_i32 : i32, i32
  }
}

</mosaic_0001>

<llo_original>
// kernel: tpu_custom_call.1
$region0: #{tpu_custom_call.1}
  #allocation0 [shape = 'u32[]', space=smem, size = 0x4, offset = 0x4, fixed_abs, tag = 'smem constant byte address 0x4 - core index']
  #allocation1 [shape = 'u32[144,128]{1,0:T(1,128)}', space=vmem, size = 0x12000, scoped, tag = 'internal scratch']
  #allocation2 [shape = 'f32[64,32]{1,0:T(8,128)}', space=vmem, size = 0x8000, scoped, tag = 'scratch operand']
  %s0 = inlined_call_operand.vmem [shape: bf16[64,64], index: 0, kind: input, shape index: {}]
  %s1 = inlined_call_operand.vmem [shape: f32[64,32], index: 1, kind: input, shape index: {}]
  %s2 = inlined_call_operand.vmem [shape: f32[64,32], index: 2, kind: output, shape index: {}]
  %s3 = sld [smem:[#allocation0]]
  $region26: #{tpu_custom_call.1} parent=0
    _
  %s5 = ssub.s32 1, %s3
  %s6 = scalar_select 0, %s5, %s3
  // Predicated region
  $region2: #{tpu_custom_call.1} parent=0 // pred_check
    _
  $region3: #{tpu_custom_call.1} parent=0 // pred_check_branch
    %8 = sbr.rel (0) target = $region5
  $region4: #{tpu_custom_call.1} parent=0 // pred_region
    _
  $region5: #{tpu_custom_call.1} parent=0 // pred_fallthru
    _
  // Predicated region
  $region6: #{tpu_custom_call.1} parent=0 // pred_check
    _
  $region7: #{tpu_custom_call.1} parent=0 // pred_check_branch
    %10 = sbr.rel (0) target = $region9
  $region8: #{tpu_custom_call.1} parent=0 // pred_region
    _
  $region9: #{tpu_custom_call.1} parent=0 // pred_fallthru
    _
  %p12 = scmp.eq.s32.totalorder 0, 0
  // Predicated region
  $region10: #{tpu_custom_call.1} parent=0 // pred_check
    %p13 = pneg %p12
  $region11: #{tpu_custom_call.1} parent=0 // pred_check_branch
    %15 = sbr.rel (%p13) target = $region13
  $region12: #{tpu_custom_call.1} parent=0 // pred_region
    %vm16 = vcmask 261120
    %17 = vst.msk [vmem:[#allocation2] sm:$0xff] %vm16, 0.0
    %18 = vst.msk [vmem:[#allocation2 + $0x8] sm:$0xff] %vm16, 0.0
    %19 = vst.msk [vmem:[#allocation2 + $0x10] sm:$0xff] %vm16, 0.0
    %20 = vst.msk [vmem:[#allocation2 + $0x18] sm:$0xff] %vm16, 0.0
    %21 = vst.msk [vmem:[#allocation2 + $0x20] sm:$0xff] %vm16, 0.0
    %22 = vst.msk [vmem:[#allocation2 + $0x28] sm:$0xff] %vm16, 0.0
    %23 = vst.msk [vmem:[#allocation2 + $0x30] sm:$0xff] %vm16, 0.0
    %24 = vst.msk [vmem:[#allocation2 + $0x38] sm:$0xff] %vm16, 0.0
  $region13: #{tpu_custom_call.1} parent=0 // pred_fallthru
    _
  %v25 = vld [vmem:[#allocation2] sm:$0xff]
  %v26 = vld [vmem:[#allocation2 + $0x8] sm:$0xff]
  %v27 = vld [vmem:[#allocation2 + $0x10] sm:$0xff]
  %v28 = vld [vmem:[#allocation2 + $0x18] sm:$0xff]
  %v29 = vld [vmem:[#allocation2 + $0x20] sm:$0xff]
  %v30 = vld [vmem:[#allocation2 + $0x28] sm:$0xff]
  %v31 = vld [vmem:[#allocation2 + $0x30] sm:$0xff]
  %v32 = vld [vmem:[#allocation2 + $0x38] sm:$0xff]
  %v33 = vld [vmem:[%s0] sm:$0xf]
  %v34 = vld [vmem:[%s0 + $0x4] sm:$0xf]
  %v35 = vld [vmem:[%s0 + $0x8] sm:$0xf]
  %v36 = vld [vmem:[%s0 + $0xc] sm:$0xf]
  %v37 = vld [vmem:[%s0 + $0x10] sm:$0xf]
  %v38 = vld [vmem:[%s0 + $0x14] sm:$0xf]
  %v39 = vld [vmem:[%s0 + $0x18] sm:$0xf]
  %v40 = vld [vmem:[%s0 + $0x1c] sm:$0xf]
  %v41 = vld [vmem:[%s1] sm:$0xff]
  %v42 = vld [vmem:[%s1 + $0x8] sm:$0xff]
  %v43 = vld [vmem:[%s1 + $0x10] sm:$0xff]
  %v44 = vld [vmem:[%s1 + $0x18] sm:$0xff]
  %v45 = vld [vmem:[%s1 + $0x20] sm:$0xff]
  %v46 = vld [vmem:[%s1 + $0x28] sm:$0xff]
  %v47 = vld [vmem:[%s1 + $0x30] sm:$0xff]
  %v48 = vld [vmem:[%s1 + $0x38] sm:$0xff]
  %v49 = vpack.c.bf16 %v42, %v41
  %v50 = vpack.c.bf16 %v44, %v43
  %v51 = vpack.c.bf16 %v46, %v45
  %v52 = vpack.c.bf16 %v48, %v47
  %v61 = vunpack.c.l.b16 %v33
  %v62 = vunpack.c.l.b16 %v34
  %v63 = vunpack.c.l.b16 %v35
  %v64 = vunpack.c.l.b16 %v36
  %v65 = vunpack.c.l.b16 %v37
  %v66 = vunpack.c.l.b16 %v38
  %v67 = vunpack.c.l.b16 %v39
  %v68 = vunpack.c.l.b16 %v40
  %v69 = vpack.c.b16 %v62, %v61
  %v70 = vpack.c.b16 %v64, %v63
  %v71 = vpack.c.b16 %v66, %v65
  %v72 = vpack.c.b16 %v68, %v67
  %vm73 = vcmask 523264
  %v75 = vsel %vm73, %v69, 0
  %v78 = vsel %vm73, %v70, 0
  %v81 = vsel %vm73, %v71, 0
  %v84 = vsel %vm73, %v72, 0
  %86 = vmatprep.subr.bf16.mxu0 0
  %87 = vmatpush1.bf16.msra.mxu0 %v49
  %88 = vmatprep.subr.bf16.mxu0 0
  %89 = vmatpush1.bf16.msra.mxu0 %v50
  %90 = vmatprep.subr.bf16.mxu0 0
  %91 = vmatpush1.bf16.msra.mxu0 %v51
  %92 = vmatprep.subr.bf16.mxu0 0
  %93 = vmatpush1.bf16.msra.mxu0 %v52
  %94 = vmatprep.subr.bf16.mxu0 0
  %95 = vmatpush1.bf16.msra.mxu0 0
  %96 = vmatprep.subr.bf16.mxu0 0
  %97 = vmatpush1.bf16.msra.mxu0 0
  %98 = vmatprep.subr.bf16.mxu0 0
  %99 = vmatpush1.bf16.msra.mxu0 0
  %100 = vmatprep.subr.bf16.mxu0 0
  %101 = vmatpush1.bf16.msra.mxu0 0
  %102 = vmatprep.subr.bf16.mxu0 0
  %103 = vmatpush1.bf16.msra.mxu0 0
  %104 = vmatprep.subr.bf16.mxu0 0
  %105 = vmatpush1.bf16.msra.mxu0 0
  %106 = vmatprep.subr.bf16.mxu0 0
  %107 = vmatpush1.bf16.msra.mxu0 0
  %108 = vmatprep.subr.bf16.mxu0 0
  %109 = vmatpush1.bf16.msra.mxu0 0
  %110 = vmatprep.subr.bf16.mxu0 0
  %111 = vmatpush1.bf16.msra.mxu0 0
  %112 = vmatprep.subr.bf16.mxu0 0
  %113 = vmatpush1.bf16.msra.mxu0 0
  %114 = vmatprep.subr.bf16.mxu0 0
  %115 = vmatpush1.bf16.msra.mxu0 0
  %116 = vmatprep.subr.bf16.mxu0 0
  %117 = vmatpush1.bf16.msra.mxu0 0
  %118 = vmatprep.mubr.bf16.mxu0 0
  %119 = vmatmul.mubr.bf16.gmra.mrb[0].mxu0 %v75
  %v120 = vpop.f32.mrb[0].mxu0
  %v121 = vadd.f32 0.0, %v120
  %v122 = vpop.f32.mrb[0].mxu0
  %v123 = vpop.f32.mrb[0].mxu0
  %v124 = vadd.f32 0.0, %v123
  %v125 = vpop.f32.mrb[0].mxu0
  %126 = vmatprep.mubr.bf16.mxu0 0
  %127 = vmatmul.mubr.bf16.gmra.mrb[0].mxu0 %v78
  %v128 = vpop.f32.mrb[0].mxu0
  %v129 = vadd.f32 0.0, %v128
  %v130 = vpop.f32.mrb[0].mxu0
  %v131 = vpop.f32.mrb[0].mxu0
  %v132 = vadd.f32 0.0, %v131
  %v133 = vpop.f32.mrb[0].mxu0
  %134 = vmatprep.mubr.bf16.mxu0 0
  %135 = vmatmul.mubr.bf16.gmra.mrb[0].mxu0 %v81
  %v136 = vpop.f32.mrb[0].mxu0
  %v137 = vadd.f32 0.0, %v136
  %v138 = vpop.f32.mrb[0].mxu0
  %v139 = vpop.f32.mrb[0].mxu0
  %v140 = vadd.f32 0.0, %v139
  %v141 = vpop.f32.mrb[0].mxu0
  %142 = vmatprep.mubr.bf16.mxu0 0
  %143 = vmatmul.mubr.bf16.gmra.mrb[0].mxu0 %v84
  %v144 = vpop.f32.mrb[0].mxu0
  %v145 = vadd.f32 0.0, %v144
  %v146 = vpop.f32.mrb[0].mxu0
  %v147 = vpop.f32.mrb[0].mxu0
  %v148 = vadd.f32 0.0, %v147
  %v149 = vpop.f32.mrb[0].mxu0
  %150 = vdwg.mxu0
  %v151 = vadd.f32 %v25, %v121
  %v152 = vadd.f32 %v26, %v124
  %v153 = vadd.f32 %v27, %v129
  %v154 = vadd.f32 %v28, %v132
  %v155 = vadd.f32 %v29, %v137
  %v156 = vadd.f32 %v30, %v140
  %v157 = vadd.f32 %v31, %v145
  %v158 = vadd.f32 %v32, %v148
  %vm159 = vcmask 261120
  %160 = vst.msk [vmem:[#allocation2] sm:$0xff] %vm159, %v151
  %161 = vst.msk [vmem:[#allocation2 + $0x8] sm:$0xff] %vm159, %v152
  %162 = vst.msk [vmem:[#allocation2 + $0x10] sm:$0xff] %vm159, %v153
  %163 = vst.msk [vmem:[#allocation2 + $0x18] sm:$0xff] %vm159, %v154
  %164 = vst.msk [vmem:[#allocation2 + $0x20] sm:$0xff] %vm159, %v155
  %165 = vst.msk [vmem:[#allocation2 + $0x28] sm:$0xff] %vm159, %v156
  %166 = vst.msk [vmem:[#allocation2 + $0x30] sm:$0xff] %vm159, %v157
  %167 = vst.msk [vmem:[#allocation2 + $0x38] sm:$0xff] %vm159, %v158
  // Predicated region
  $region14: #{tpu_custom_call.1} parent=0 // pred_check
    %p168 = pneg %p12
  $region15: #{tpu_custom_call.1} parent=0 // pred_check_branch
    %170 = sbr.rel (%p168) target = $region17
  $region16: #{tpu_custom_call.1} parent=0 // pred_region
    %v171 = vld [vmem:[#allocation2] sm:$0xff]
    %v172 = vld [vmem:[#allocation2 + $0x8] sm:$0xff]
    %v173 = vld [vmem:[#allocation2 + $0x10] sm:$0xff]
    %v174 = vld [vmem:[#allocation2 + $0x18] sm:$0xff]
    %v175 = vld [vmem:[#allocation2 + $0x20] sm:$0xff]
    %v176 = vld [vmem:[#allocation2 + $0x28] sm:$0xff]
    %v177 = vld [vmem:[#allocation2 + $0x30] sm:$0xff]
    %v178 = vld [vmem:[#allocation2 + $0x38] sm:$0xff]
    %179 = vst.msk [vmem:[%s2] sm:$0xff] %vm159, %v171
    %180 = vst.msk [vmem:[%s2 + $0x8] sm:$0xff] %vm159, %v172
    %181 = vst.msk [vmem:[%s2 + $0x10] sm:$0xff] %vm159, %v173
    %182 = vst.msk [vmem:[%s2 + $0x18] sm:$0xff] %vm159, %v174
    %183 = vst.msk [vmem:[%s2 + $0x20] sm:$0xff] %vm159, %v175
    %184 = vst.msk [vmem:[%s2 + $0x28] sm:$0xff] %vm159, %v176
    %185 = vst.msk [vmem:[%s2 + $0x30] sm:$0xff] %vm159, %v177
    %186 = vst.msk [vmem:[%s2 + $0x38] sm:$0xff] %vm159, %v178
  $region17: #{tpu_custom_call.1} parent=0 // pred_fallthru
    _
  // Predicated region
  $region18: #{tpu_custom_call.1} parent=0 // pred_check
    _
  $region19: #{tpu_custom_call.1} parent=0 // pred_check_branch
    %188 = sbr.rel (0) target = $region21
  $region20: #{tpu_custom_call.1} parent=0 // pred_region
    _
  $region21: #{tpu_custom_call.1} parent=0 // pred_fallthru
    _
  // Predicated region
  $region22: #{tpu_custom_call.1} parent=0 // pred_check
    _
  $region23: #{tpu_custom_call.1} parent=0 // pred_check_branch
    %190 = sbr.rel (0) target = $region25
  $region24: #{tpu_custom_call.1} parent=0 // pred_region
    _
  $region25: #{tpu_custom_call.1} parent=0 // pred_fallthru
    _

</llo_original>
